<compile_context>
chip_gen: v6e
topology: v6e:2x2x1
jax: 0.10.0
libtpu: 0.0.40
codegen_flags: <defaults>
</compile_context>

<pallas_src>
import jax
import jax.numpy as jnp
from jax.experimental import pallas as pl
from jax.experimental.pallas import tpu as pltpu


def _round_up(x, m):
    return (x + m - 1) // m * m


def _make_kernel(out_l_sizes):
    """Kernel body for a static stack of fused hidden layers.

    out_l_sizes[i] is the width of the linear (non-ReLU) branch of hidden
    layer i, used as the lane threshold for the fused ReLU mask.
    """
    num_hidden = len(out_l_sizes)

    def kernel(*refs):
        # refs = [x, (Wcat0, bcat0), ..., (WcatN-1, bcatN-1), Wout, bout, out]
        x_ref = refs[0]
        o_ref = refs[-1]
        p = refs[1:-1]

        x = x_ref[...]
        for i in range(num_hidden):
            w_ref, b_ref = p[2 * i], p[2 * i + 1]
            # One fused matmul producing [xl | xn] directly in concatenated
            # lane layout: y = x @ [Wl.T | Wn.T] + [bl | bn].
            y = (
                jnp.dot(x, w_ref[...], preferred_element_type=jnp.float32)
                + b_ref[...]
            )
            # ReLU only on the xn lanes (lane index >= out_l).
            lane = jax.lax.broadcasted_iota(jnp.int32, y.shape, 1)
            x = jnp.where(lane >= out_l_sizes[i], jnp.maximum(y, 0.0), y)

        wo_ref, bo_ref = p[-2], p[-1]
        o_ref[...] = (
            jnp.dot(x, wo_ref[...], preferred_element_type=jnp.float32)
            + bo_ref[...]
        ).astype(o_ref.dtype)

    return kernel


def pack_params(weights_n, biases_n, weights_l, biases_l,
                param_dtype=jnp.float32):
    """One-time parameter packing (hoisted out of the per-call path).

    Input (PyTorch layout): weights (out, in), biases (out,).
    weights_l / biases_l have one extra trailing entry: the output layer.
    """
    num_hidden = len(weights_n)
    assert len(weights_l) == num_hidden + 1

    hidden = []
    out_l_sizes = []
    for i in range(num_hidden):
        wl = jnp.asarray(weights_l[i], jnp.float32).T       # (in, out_l)
        wn = jnp.asarray(weights_n[i], jnp.float32).T       # (in, out_n)
        bl = jnp.asarray(biases_l[i], jnp.float32).reshape(1, -1)
        bn = jnp.asarray(biases_n[i], jnp.float32).reshape(1, -1)
        w_cat = jnp.concatenate([wl, wn], axis=1).astype(param_dtype)
        b_cat = jnp.concatenate([bl, bn], axis=1)            # biases stay f32
        hidden.append((w_cat, b_cat))
        out_l_sizes.append(wl.shape[1])

    wo = jnp.asarray(weights_l[-1], jnp.float32).T           # (in, out)
    bo = jnp.asarray(biases_l[-1], jnp.float32).reshape(1, -1)
    out_dim = wo.shape[1]
    out_pad = _round_up(out_dim, 128)                        # lane-dense store
    if out_pad != out_dim:
        wo = jnp.pad(wo, ((0, 0), (0, out_pad - out_dim)))
        bo = jnp.pad(bo, ((0, 0), (0, out_pad - out_dim)))
    wo = wo.astype(param_dtype)

    return {
        "hidden": hidden,
        "out": (wo, bo),
        "out_l_sizes": tuple(out_l_sizes),
        "out_dim": out_dim,
    }


def rnetwork_acc_forward(x, packed, *, batch_tile=256):
    """Pallas forward pass over pre-packed parameters."""
    hidden = packed["hidden"]
    wo, bo = packed["out"]
    out_l_sizes = packed["out_l_sizes"]
    out_dim = packed["out_dim"]
    out_pad = wo.shape[1]

    x = jnp.asarray(x, jnp.float32)
    batch, d_in = x.shape

    # Batch tile: sublane-aligned (multiple of 8), capped at batch_tile.
    tm = min(_round_up(batch, 8), batch_tile)
    padded_batch = _round_up(batch, tm)
    if padded_batch != batch:
        x = jnp.pad(x, ((0, padded_batch - batch), (0, 0)))
    grid = (padded_batch // tm,)

    args = [x]
    in_specs = [pl.BlockSpec((tm, d_in), lambda i: (i, 0))]
    for w_cat, b_cat in hidden:
        args += [w_cat, b_cat]
        # Constant index_map -> weights DMA'd once, VMEM-resident across grid.
        in_specs += [
            pl.BlockSpec(w_cat.shape, lambda i: (0, 0)),
            pl.BlockSpec(b_cat.shape, lambda i: (0, 0)),
        ]
    args += [wo, bo]
    in_specs += [
        pl.BlockSpec(wo.shape, lambda i: (0, 0)),
        pl.BlockSpec(bo.shape, lambda i: (0, 0)),
    ]

    out_specs = pl.BlockSpec((tm, out_pad), lambda i: (i, 0))

    # Explicit VMEM budget: resident params + double-buffered x/out tiles.
    param_bytes = sum(int(a.size) * a.dtype.itemsize for a in args[1:])
    act_bytes = 2 * tm * (d_in + out_pad) * 4
    vmem_limit = min(max(2 * param_bytes + 2 * act_bytes + (4 << 20),
                         16 << 20),
                     64 << 20)

    out = pl.pallas_call(
        _make_kernel(out_l_sizes),
        out_shape=jax.ShapeDtypeStruct((padded_batch, out_pad), jnp.float32),
        grid=grid,
        in_specs=in_specs,
        out_specs=out_specs,
        compiler_params=pltpu.CompilerParams(
            dimension_semantics=("parallel",),
            vmem_limit_bytes=int(vmem_limit),
        ),
    )(*args)

    return out[:batch, :out_dim]


def rnetwork_acc_reference(x, weights_n, biases_n, weights_l, biases_l):
    """Pure-JAX reference matching the PyTorch forward semantics."""
    num_hidden = len(weights_n)
    for i in range(num_hidden):
        xn = jax.nn.relu(x @ weights_n[i].T + biases_n[i])
        xl = x @ weights_l[i].T + biases_l[i]
        x = jnp.concatenate([xl, xn], axis=1)
    return x @ weights_l[-1].T + biases_l[-1]


if __name__ == "__main__":
    key = jax.random.PRNGKey(0)

    # Synthetic deterministic parameters (the module normally loads .mat files;
    # here we just construct consistent shapes).
    batch = 8
    d_in = 128          # input feature dim
    out_n = 128         # nonlinear-branch width per hidden layer
    out_l = 128         # linear-branch width per hidden layer
    d_out = 64          # output layer width (exercises the lane-pad path)
    num_hidden = 2

    keys = jax.random.split(key, 4 * num_hidden + 3)
    ki = iter(keys)

    weights_n, biases_n, weights_l, biases_l = [], [], [], []
    in_dim = d_in
    for _ in range(num_hidden):
        weights_n.append(
            jax.random.normal(next(ki), (out_n, in_dim), jnp.float32) * 0.05)
        biases_n.append(
            jax.random.normal(next(ki), (out_n,), jnp.float32) * 0.05)
        weights_l.append(
            jax.random.normal(next(ki), (out_l, in_dim), jnp.float32) * 0.05)
        biases_l.append(
            jax.random.normal(next(ki), (out_l,), jnp.float32) * 0.05)
        in_dim = out_l + out_n
    # output layer (weights_L[-1], biases_L[-1] in the PyTorch module)
    weights_l.append(
        jax.random.normal(next(ki), (d_out, in_dim), jnp.float32) * 0.05)
    biases_l.append(
        jax.random.normal(next(ki), (d_out,), jnp.float32) * 0.05)

    x = jax.random.normal(next(ki), (batch, d_in), jnp.float32)

    # One-time packing (transposes / branch fusion hoisted out of the call).
    packed = pack_params(weights_n, biases_n, weights_l, biases_l,
                         param_dtype=jnp.float32)

    out = rnetwork_acc_forward(x, packed)
    out = jax.block_until_ready(out)

    ref = rnetwork_acc_reference(x, weights_n, biases_n, weights_l, biases_l)
    assert out.shape == (batch, d_out), out.shape
    assert jnp.allclose(out, ref, atol=1e-4, rtol=1e-4), "mismatch vs reference"

    print("KERNEL_OK")
</pallas_src>

<mosaic_0001>
module attributes {stable_mosaic.version = 11 : i64} {
  func.func @kernel(%arg0: i32, %arg1: memref<8x128xf32, #tpu.memory_space<vmem>>, %arg2: memref<128x256xf32, #tpu.memory_space<vmem>>, %arg3: memref<1x256xf32, #tpu.memory_space<vmem>>, %arg4: memref<256x256xf32, #tpu.memory_space<vmem>>, %arg5: memref<1x256xf32, #tpu.memory_space<vmem>>, %arg6: memref<256x128xf32, #tpu.memory_space<vmem>>, %arg7: memref<1x128xf32, #tpu.memory_space<vmem>>, %arg8: memref<8x128xf32, #tpu.memory_space<vmem>>) attributes {dimension_semantics = [#tpu.dimension_semantics<parallel>], iteration_bounds = array<i64: 1>, scalar_prefetch = 0 : i64, scratch_operands = 0 : i64, tpu.core_type = #tpu.core_type<tc>, window_params = [{transform_indices = @transform_0, window_bounds = array<i64: 8, 128>}, {pipeline_mode = #tpu.pipeline_mode<synchronous>, transform_indices = @transform_1, window_bounds = array<i64: 128, 256>}, {pipeline_mode = #tpu.pipeline_mode<synchronous>, transform_indices = @transform_2, window_bounds = array<i64: 1, 256>}, {pipeline_mode = #tpu.pipeline_mode<synchronous>, transform_indices = @transform_3, window_bounds = array<i64: 256, 256>}, {pipeline_mode = #tpu.pipeline_mode<synchronous>, transform_indices = @transform_4, window_bounds = array<i64: 1, 256>}, {pipeline_mode = #tpu.pipeline_mode<synchronous>, transform_indices = @transform_5, window_bounds = array<i64: 256, 128>}, {pipeline_mode = #tpu.pipeline_mode<synchronous>, transform_indices = @transform_6, window_bounds = array<i64: 1, 128>}, {transform_indices = @transform_7, window_bounds = array<i64: 8, 128>}]} {
    %c0 = arith.constant 0 : index
    %c0_0 = arith.constant 0 : index
    %0 = vector.load %arg1[%c0, %c0_0] : memref<8x128xf32, #tpu.memory_space<vmem>>, vector<8x128xf32>
    %c0_1 = arith.constant 0 : index
    %c0_2 = arith.constant 0 : index
    %1 = vector.load %arg2[%c0_1, %c0_2] : memref<128x256xf32, #tpu.memory_space<vmem>>, vector<128x256xf32>
    %cst = arith.constant dense<0.000000e+00> : vector<8x256xf32>
    %2 = tpu.matmul %0, %1, %cst {dimension_numbers = #tpu.dot_dimension_numbers<[1], [0], [0], [1], [0, 0, 1, 1], [], []>} : vector<8x128xf32>, vector<128x256xf32>, vector<8x256xf32> -> vector<8x256xf32>
    %c0_3 = arith.constant 0 : index
    %c0_4 = arith.constant 0 : index
    %3 = vector.load %arg3[%c0_3, %c0_4] : memref<1x256xf32, #tpu.memory_space<vmem>>, vector<1x256xf32>
    %4 = vector.broadcast %3 : vector<1x256xf32> to vector<8x256xf32>
    %5 = arith.addf %2, %4 : vector<8x256xf32>
    %6 = tpu.iota {dimensions = array<i32: 1>} : vector<8x256xi32>
    %c128_i32 = arith.constant 128 : i32
    %7 = vector.broadcast %c128_i32 : i32 to vector<8x256xi32>
    %8 = arith.cmpi sge, %6, %7 : vector<8x256xi32>
    %cst_5 = arith.constant 0.000000e+00 : f32
    %9 = vector.broadcast %cst_5 : f32 to vector<8x256xf32>
    %10 = arith.maximumf %5, %9 : vector<8x256xf32>
    %11 = arith.select %8, %10, %5 : vector<8x256xi1>, vector<8x256xf32>
    %c0_6 = arith.constant 0 : index
    %c0_7 = arith.constant 0 : index
    %12 = vector.load %arg4[%c0_6, %c0_7] : memref<256x256xf32, #tpu.memory_space<vmem>>, vector<256x256xf32>
    %cst_8 = arith.constant dense<0.000000e+00> : vector<8x256xf32>
    %13 = tpu.matmul %11, %12, %cst_8 {dimension_numbers = #tpu.dot_dimension_numbers<[1], [0], [0], [1], [0, 0, 1, 1], [], []>} : vector<8x256xf32>, vector<256x256xf32>, vector<8x256xf32> -> vector<8x256xf32>
    %c0_9 = arith.constant 0 : index
    %c0_10 = arith.constant 0 : index
    %14 = vector.load %arg5[%c0_9, %c0_10] : memref<1x256xf32, #tpu.memory_space<vmem>>, vector<1x256xf32>
    %15 = vector.broadcast %14 : vector<1x256xf32> to vector<8x256xf32>
    %16 = arith.addf %13, %15 : vector<8x256xf32>
    %17 = tpu.iota {dimensions = array<i32: 1>} : vector<8x256xi32>
    %c128_i32_11 = arith.constant 128 : i32
    %18 = vector.broadcast %c128_i32_11 : i32 to vector<8x256xi32>
    %19 = arith.cmpi sge, %17, %18 : vector<8x256xi32>
    %cst_12 = arith.constant 0.000000e+00 : f32
    %20 = vector.broadcast %cst_12 : f32 to vector<8x256xf32>
    %21 = arith.maximumf %16, %20 : vector<8x256xf32>
    %22 = arith.select %19, %21, %16 : vector<8x256xi1>, vector<8x256xf32>
    %c0_13 = arith.constant 0 : index
    %c0_14 = arith.constant 0 : index
    %23 = vector.load %arg6[%c0_13, %c0_14] : memref<256x128xf32, #tpu.memory_space<vmem>>, vector<256x128xf32>
    %cst_15 = arith.constant dense<0.000000e+00> : vector<8x128xf32>
    %24 = tpu.matmul %22, %23, %cst_15 {dimension_numbers = #tpu.dot_dimension_numbers<[1], [0], [0], [1], [0, 0, 1, 1], [], []>} : vector<8x256xf32>, vector<256x128xf32>, vector<8x128xf32> -> vector<8x128xf32>
    %c0_16 = arith.constant 0 : index
    %c0_17 = arith.constant 0 : index
    %25 = vector.load %arg7[%c0_16, %c0_17] : memref<1x128xf32, #tpu.memory_space<vmem>>, vector<1x128xf32>
    %26 = vector.broadcast %25 : vector<1x128xf32> to vector<8x128xf32>
    %27 = arith.addf %24, %26 : vector<8x128xf32>
    %c0_18 = arith.constant 0 : index
    %c0_19 = arith.constant 0 : index
    %28 = vector.load %arg8[%c0_18, %c0_19] : memref<8x128xf32, #tpu.memory_space<vmem>>, vector<8x128xf32>
    tpu.vector_store %arg8[%c0_18, %c0_19], %27 {strides = array<i32>} : memref<8x128xf32, #tpu.memory_space<vmem>>, vector<8x128xf32>,
    return
  }
  func.func @transform_0(%arg0: i32) -> (i32, i32) {
    %c0_i32 = arith.constant 0 : i32
    %c0_i32_0 = arith.constant 0 : i32
    return %arg0, %c0_i32 : i32, i32
  }
  func.func @transform_1(%arg0: i32) -> (i32, i32) {
    %c0_i32 = arith.constant 0 : i32
    %c0_i32_0 = arith.constant 0 : i32
    %c0_i32_1 = arith.constant 0 : i32
    return %c0_i32, %c0_i32_0 : i32, i32
  }
  func.func @transform_2(%arg0: i32) -> (i32, i32) {
    %c0_i32 = arith.constant 0 : i32
    %c0_i32_0 = arith.constant 0 : i32
    %c0_i32_1 = arith.constant 0 : i32
    return %c0_i32, %c0_i32_0 : i32, i32
  }
  func.func @transform_3(%arg0: i32) -> (i32, i32) {
    %c0_i32 = arith.constant 0 : i32
    %c0_i32_0 = arith.constant 0 : i32
    %c0_i32_1 = arith.constant 0 : i32
    return %c0_i32, %c0_i32_0 : i32, i32
  }
  func.func @transform_4(%arg0: i32) -> (i32, i32) {
    %c0_i32 = arith.constant 0 : i32
    %c0_i32_0 = arith.constant 0 : i32
    %c0_i32_1 = arith.constant 0 : i32
    return %c0_i32, %c0_i32_0 : i32, i32
  }
  func.func @transform_5(%arg0: i32) -> (i32, i32) {
    %c0_i32 = arith.constant 0 : i32
    %c0_i32_0 = arith.constant 0 : i32
    %c0_i32_1 = arith.constant 0 : i32
    return %c0_i32, %c0_i32_0 : i32, i32
  }
  func.func @transform_6(%arg0: i32) -> (i32, i32) {
    %c0_i32 = arith.constant 0 : i32
    %c0_i32_0 = arith.constant 0 : i32
    %c0_i32_1 = arith.constant 0 : i32
    return %c0_i32, %c0_i32_0 : i32, i32
  }
  func.func @transform_7(%arg0: i32) -> (i32, i32) {
    %c0_i32 = arith.constant 0 : i32
    %c0_i32_0 = arith.constant 0 : i32
    return %arg0, %c0_i32 : i32, i32
  }
}

</mosaic_0001>

<llo_original>
// kernel: tpu_custom_call.1
$region0: #{tpu_custom_call.1}
  #allocation0 [shape = 'u32[]', space=smem, size = 0x4, offset = 0x4, fixed_abs, tag = 'smem constant byte address 0x4 - core index']
  #allocation1 [shape = 'u32[144,128]{1,0:T(1,128)}', space=vmem, size = 0x12000, scoped, tag = 'internal scratch']
  %s0 = inlined_call_operand.hbm [shape: f32[8,128], index: 0, kind: input, shape index: {}]
  %s1 = inlined_call_operand.hbm [shape: f32[128,256], index: 1, kind: input, shape index: {}]
  %s2 = inlined_call_operand.vmem [shape: f32[1,256], index: 2, kind: input, shape index: {}]
  %s3 = inlined_call_operand.hbm [shape: f32[256,256], index: 3, kind: input, shape index: {}]
  %s4 = inlined_call_operand.vmem [shape: f32[1,256], index: 4, kind: input, shape index: {}]
  %s5 = inlined_call_operand.hbm [shape: f32[256,128], index: 5, kind: input, shape index: {}]
  %s6 = inlined_call_operand.vmem [shape: f32[1,128], index: 6, kind: input, shape index: {}]
  %s7 = inlined_call_operand.hbm [shape: f32[8,128], index: 7, kind: output, shape index: {}]
  %s8 = sld [smem:[#allocation0]]
  $region54: #{tpu_custom_call.1} parent=0
    _
  %s10 = ssub.s32 1, %s8
  %s11 = scalar_select 0, %s10, %s8
  $region1: #{tpu_custom_call.1} parent=0
    #allocation2 [shape = 'u8[4096]{0}', space=vmem, size = 0x1000, scoped, tag = 'input window, operand 0, single buffered']
    #allocation3 [shape = 's32[1]{0}', space=sflag, size = 0x4, scoped, tag = 'scoped memory for tpu_custom_call.1']
    #allocation4 [shape = 's32[1]{0}', space=sflag, size = 0x4, scoped, tag = 'scoped memory for tpu_custom_call.1']
    #allocation5 [shape = 'u8[131072]{0}', space=vmem, size = 0x20000, scoped, tag = 'input window, operand 1, single buffered']
    #allocation6 [shape = 's32[1]{0}', space=sflag, size = 0x4, scoped, tag = 'scoped memory for tpu_custom_call.1']
    #allocation7 [shape = 'u8[262144]{0}', space=vmem, size = 0x40000, scoped, tag = 'input window, operand 3, single buffered']
    #allocation8 [shape = 'u8[131072]{0}', space=vmem, size = 0x20000, scoped, tag = 'input window, operand 5, single buffered']
    #allocation9 [shape = 's32[1]{0}', space=sflag, size = 0x4, scoped, tag = 'scoped memory for tpu_custom_call.1']
    #allocation10 [shape = 'u8[4096]{0}', space=vmem, size = 0x1000, scoped, tag = 'output window, operand 0, single buffered']
    %12 = vsyncpa [#allocation3], 0
    %13 = vsyncpa [#allocation6], 0
    %14 = vsyncpa [#allocation9], 0
    %15 = vsyncpa [#allocation4], 0
    // Predicated region
    $region2: #{tpu_custom_call.1} parent=1 // pred_check
      _
    $region3: #{tpu_custom_call.1} parent=1 // pred_check_branch
      %17 = sbr.rel (0) target = $region5
    $region4: #{tpu_custom_call.1} parent=1 // pred_region
      %s19 = ssub.s32 128, 128
      %20 = vsyncadd [#allocation3], %s19
      %s22 = sshll.u32 [#allocation2], 4
      %s23 = int_to_ptr.vmem [resolvable:$true] %s22
      %25 = dma.hbm_to_vmem [thread:$0]  %s0, 128, %s23, [#allocation3]
    $region5: #{tpu_custom_call.1} parent=1 // pred_fallthru
      _
    // Predicated region
    $region6: #{tpu_custom_call.1} parent=1 // pred_check
      _
    $region7: #{tpu_custom_call.1} parent=1 // pred_check_branch
      %27 = sbr.rel (0) target = $region9
    $region8: #{tpu_custom_call.1} parent=1 // pred_region
      %s29 = ssub.s32 4096, 4096
      %30 = vsyncadd [#allocation6], %s29
      %s31 = sshll.u32 [#allocation5], 4
      %s32 = int_to_ptr.vmem [resolvable:$true] %s31
      %37 = dma.hbm_to_vmem [thread:$0]  %s1, 4096, %s32, [#allocation6], 256, 256, 16
    $region9: #{tpu_custom_call.1} parent=1 // pred_fallthru
      _
    // Predicated region
    $region10: #{tpu_custom_call.1} parent=1 // pred_check
      _
    $region11: #{tpu_custom_call.1} parent=1 // pred_check_branch
      %39 = sbr.rel (0) target = $region13
    $region12: #{tpu_custom_call.1} parent=1 // pred_region
      _
    $region13: #{tpu_custom_call.1} parent=1 // pred_fallthru
      _
    // Predicated region
    $region14: #{tpu_custom_call.1} parent=1 // pred_check
      _
    $region15: #{tpu_custom_call.1} parent=1 // pred_check_branch
      %41 = sbr.rel (0) target = $region17
    $region16: #{tpu_custom_call.1} parent=1 // pred_region
      %s43 = ssub.s32 8192, 8192
      %44 = vsyncadd [#allocation6], %s43
      %s45 = sshll.u32 [#allocation7], 4
      %s46 = int_to_ptr.vmem [resolvable:$true] %s45
      %51 = dma.hbm_to_vmem [thread:$0]  %s3, 8192, %s46, [#allocation6], 256, 256, 16
    $region17: #{tpu_custom_call.1} parent=1 // pred_fallthru
      _
    // Predicated region
    $region18: #{tpu_custom_call.1} parent=1 // pred_check
      _
    $region19: #{tpu_custom_call.1} parent=1 // pred_check_branch
      %53 = sbr.rel (0) target = $region21
    $region20: #{tpu_custom_call.1} parent=1 // pred_region
      _
    $region21: #{tpu_custom_call.1} parent=1 // pred_fallthru
      _
    // Predicated region
    $region22: #{tpu_custom_call.1} parent=1 // pred_check
      _
    $region23: #{tpu_custom_call.1} parent=1 // pred_check_branch
      %55 = sbr.rel (0) target = $region25
    $region24: #{tpu_custom_call.1} parent=1 // pred_region
      %s57 = ssub.s32 4096, 4096
      %58 = vsyncadd [#allocation9], %s57
      %s59 = sshll.u32 [#allocation8], 4
      %s60 = int_to_ptr.vmem [resolvable:$true] %s59
      %65 = dma.hbm_to_vmem [thread:$0]  %s5, 4096, %s60, [#allocation9], 128, 128, 8
    $region25: #{tpu_custom_call.1} parent=1 // pred_fallthru
      _
    // Predicated region
    $region26: #{tpu_custom_call.1} parent=1 // pred_check
      _
    $region27: #{tpu_custom_call.1} parent=1 // pred_check_branch
      %67 = sbr.rel (0) target = $region29
    $region28: #{tpu_custom_call.1} parent=1 // pred_region
      _
    $region29: #{tpu_custom_call.1} parent=1 // pred_fallthru
      _
    // Predicated region
    $region30: #{tpu_custom_call.1} parent=1 // pred_check
      _
    $region31: #{tpu_custom_call.1} parent=1 // pred_check_branch
      %69 = sbr.rel (0) target = $region33
    $region32: #{tpu_custom_call.1} parent=1 // pred_region
      %70 = dma.done [#allocation3], 128
    $region33: #{tpu_custom_call.1} parent=1 // pred_fallthru
      _
    // Predicated region
    $region34: #{tpu_custom_call.1} parent=1 // pred_check
      _
    $region35: #{tpu_custom_call.1} parent=1 // pred_check_branch
      %72 = sbr.rel (0) target = $region37
    $region36: #{tpu_custom_call.1} parent=1 // pred_region
      %73 = dma.done [#allocation6], 4096
    $region37: #{tpu_custom_call.1} parent=1 // pred_fallthru
      _
    // Predicated region
    $region38: #{tpu_custom_call.1} parent=1 // pred_check
      _
    $region39: #{tpu_custom_call.1} parent=1 // pred_check_branch
      %75 = sbr.rel (0) target = $region41
    $region40: #{tpu_custom_call.1} parent=1 // pred_region
      %76 = dma.done [#allocation6], 8192
    $region41: #{tpu_custom_call.1} parent=1 // pred_fallthru
      _
    // Predicated region
    $region42: #{tpu_custom_call.1} parent=1 // pred_check
      _
    $region43: #{tpu_custom_call.1} parent=1 // pred_check_branch
      %78 = sbr.rel (0) target = $region45
    $region44: #{tpu_custom_call.1} parent=1 // pred_region
      %79 = dma.done [#allocation9], 4096
    $region45: #{tpu_custom_call.1} parent=1 // pred_fallthru
      _
    %v80 = vld [vmem:[#allocation2] sm:$0xff]
    %v81 = vld [vmem:[#allocation5] sm:$0xff]
    %v82 = vld [vmem:[#allocation5 + $0x8] sm:$0xff]
    %v83 = vld [vmem:[#allocation5 + $0x10] sm:$0xff]
    %v84 = vld [vmem:[#allocation5 + $0x18] sm:$0xff]
    %v85 = vld [vmem:[#allocation5 + $0x20] sm:$0xff]
    %v86 = vld [vmem:[#allocation5 + $0x28] sm:$0xff]
    %v87 = vld [vmem:[#allocation5 + $0x30] sm:$0xff]
    %v88 = vld [vmem:[#allocation5 + $0x38] sm:$0xff]
    %v89 = vld [vmem:[#allocation5 + $0x40] sm:$0xff]
    %v90 = vld [vmem:[#allocation5 + $0x48] sm:$0xff]
    %v91 = vld [vmem:[#allocation5 + $0x50] sm:$0xff]
    %v92 = vld [vmem:[#allocation5 + $0x58] sm:$0xff]
    %v93 = vld [vmem:[#allocation5 + $0x60] sm:$0xff]
    %v94 = vld [vmem:[#allocation5 + $0x68] sm:$0xff]
    %v95 = vld [vmem:[#allocation5 + $0x70] sm:$0xff]
    %v96 = vld [vmem:[#allocation5 + $0x78] sm:$0xff]
    %v97 = vld [vmem:[#allocation5 + $0x80] sm:$0xff]
    %v98 = vld [vmem:[#allocation5 + $0x88] sm:$0xff]
    %v99 = vld [vmem:[#allocation5 + $0x90] sm:$0xff]
    %v100 = vld [vmem:[#allocation5 + $0x98] sm:$0xff]
    %v101 = vld [vmem:[#allocation5 + $0xa0] sm:$0xff]
    %v102 = vld [vmem:[#allocation5 + $0xa8] sm:$0xff]
    %v103 = vld [vmem:[#allocation5 + $0xb0] sm:$0xff]
    %v104 = vld [vmem:[#allocation5 + $0xb8] sm:$0xff]
    %v105 = vld [vmem:[#allocation5 + $0xc0] sm:$0xff]
    %v106 = vld [vmem:[#allocation5 + $0xc8] sm:$0xff]
    %v107 = vld [vmem:[#allocation5 + $0xd0] sm:$0xff]
    %v108 = vld [vmem:[#allocation5 + $0xd8] sm:$0xff]
    %v109 = vld [vmem:[#allocation5 + $0xe0] sm:$0xff]
    %v110 = vld [vmem:[#allocation5 + $0xe8] sm:$0xff]
    %v111 = vld [vmem:[#allocation5 + $0xf0] sm:$0xff]
    %v112 = vld [vmem:[#allocation5 + $0xf8] sm:$0xff]
    %v113 = vld [vmem:[%s2] sm:$0x3]
    %v115 = vlaneseq
    %v116 = vshrl.u32 %v115, 7
    %v117 = vsub.s32 0, %v116
    %v118 = vrot.slane %v113, %v117
    %v119 = vlaneseq
    %v120 = vshrl.u32 %v119, 7
    %v121 = vsub.s32 1, %v120
    %v122 = vrot.slane %v113, %v121
    %125 = vmatprep.subr.mxu0 %v112
    %126 = vmatpush1.msra.mxu0 %v111
    %127 = vmatprep.subr.mxu0 %v110
    %128 = vmatpush1.msra.mxu0 %v109
    %129 = vmatprep.subr.mxu0 %v108
    %130 = vmatpush1.msra.mxu0 %v107
    %131 = vmatprep.subr.mxu0 %v106
    %132 = vmatpush1.msra.mxu0 %v105
    %133 = vmatprep.subr.mxu0 %v104
    %134 = vmatpush1.msra.mxu0 %v103
    %135 = vmatprep.subr.mxu0 %v102
    %136 = vmatpush1.msra.mxu0 %v101
    %137 = vmatprep.subr.mxu0 %v100
    %138 = vmatpush1.msra.mxu0 %v99
    %139 = vmatprep.subr.mxu0 %v98
    %140 = vmatpush1.msra.mxu0 %v97
    %141 = vmatprep.subr.mxu0 %v96
    %142 = vmatpush1.msra.mxu0 %v95
    %143 = vmatprep.subr.mxu0 %v94
    %144 = vmatpush1.msra.mxu0 %v93
    %145 = vmatprep.subr.mxu0 %v92
    %146 = vmatpush1.msra.mxu0 %v91
    %147 = vmatprep.subr.mxu0 %v90
    %148 = vmatpush1.msra.mxu0 %v89
    %149 = vmatprep.subr.mxu0 %v88
    %150 = vmatpush1.msra.mxu0 %v87
    %151 = vmatprep.subr.mxu0 %v86
    %152 = vmatpush1.msra.mxu0 %v85
    %153 = vmatprep.subr.mxu0 %v84
    %154 = vmatpush1.msra.mxu0 %v83
    %155 = vmatprep.subr.mxu0 %v82
    %156 = vmatpush1.msra.mxu0 %v81
    %157 = vmatprep.subr.mxu0 0.0
    %158 = vmatpush2.msra.mxu0 0.0
    %159 = vmatprep.subr.mxu0 0.0
    %160 = vmatpush2.msra.mxu0 0.0
    %161 = vmatprep.subr.mxu0 0.0
    %162 = vmatpush2.msra.mxu0 0.0
    %163 = vmatprep.subr.mxu0 0.0
    %164 = vmatpush2.msra.mxu0 0.0
    %165 = vmatprep.subr.mxu0 0.0
    %166 = vmatpush2.msra.mxu0 0.0
    %167 = vmatprep.subr.mxu0 0.0
    %168 = vmatpush2.msra.mxu0 0.0
    %169 = vmatprep.subr.mxu0 0.0
    %170 = vmatpush2.msra.mxu0 0.0
    %171 = vmatprep.subr.mxu0 0.0
    %172 = vmatpush2.msra.mxu0 0.0
    %173 = vmatprep.subr.mxu0 0.0
    %174 = vmatpush2.msra.mxu0 0.0
    %175 = vmatprep.subr.mxu0 0.0
    %176 = vmatpush2.msra.mxu0 0.0
    %177 = vmatprep.subr.mxu0 0.0
    %178 = vmatpush2.msra.mxu0 0.0
    %179 = vmatprep.subr.mxu0 0.0
    %180 = vmatpush2.msra.mxu0 0.0
    %181 = vmatprep.subr.mxu0 0.0
    %182 = vmatpush2.msra.mxu0 0.0
    %183 = vmatprep.subr.mxu0 0.0
    %184 = vmatpush2.msra.mxu0 0.0
    %185 = vmatprep.subr.mxu0 0.0
    %186 = vmatpush2.msra.mxu0 0.0
    %187 = vmatprep.subr.mxu0 0.0
    %188 = vmatpush2.msra.mxu0 0.0
    %189 = vmatprep.mubr.f32.mxu0 0.0
    %190 = vmatmul.mubr.f32.gmra.mxu0 %v80
    %v191 = vpop.f32.mrf.mxu0
    %v192 = vadd.f32 %v118, %v191
    %v193 = vpop.f32.mrf.mxu0
    %v194 = vadd.f32 %v122, %v193
    %195 = vdwg.mxu0
    %v196 = vlaneseq
    %v197 = vand.u32 %v196, 127
    %v198 = vadd.s32 %v197, 128
    %vm199 = vcmp.ge.s32.totalorder %v197, 128
    %vm200 = vcmp.ge.s32.totalorder %v198, 128
    %v201 = vmax.f32 %v192, 0.0
    %v202 = vmax.f32 %v194, 0.0
    %v203 = vsel %vm199, %v201, %v192
    %v204 = vsel %vm200, %v202, %v194
    %v205 = vld [vmem:[#allocation7] sm:$0xff]
    %v206 = vld [vmem:[#allocation7 + $0x8] sm:$0xff]
    %v207 = vld [vmem:[#allocation7 + $0x10] sm:$0xff]
    %v208 = vld [vmem:[#allocation7 + $0x18] sm:$0xff]
    %v209 = vld [vmem:[#allocation7 + $0x20] sm:$0xff]
    %v210 = vld [vmem:[#allocation7 + $0x28] sm:$0xff]
    %v211 = vld [vmem:[#allocation7 + $0x30] sm:$0xff]
    %v212 = vld [vmem:[#allocation7 + $0x38] sm:$0xff]
    %v213 = vld [vmem:[#allocation7 + $0x40] sm:$0xff]
    %v214 = vld [vmem:[#allocation7 + $0x48] sm:$0xff]
    %v215 = vld [vmem:[#allocation7 + $0x50] sm:$0xff]
    %v216 = vld [vmem:[#allocation7 + $0x58] sm:$0xff]
    %v217 = vld [vmem:[#allocation7 + $0x60] sm:$0xff]
    %v218 = vld [vmem:[#allocation7 + $0x68] sm:$0xff]
    %v219 = vld [vmem:[#allocation7 + $0x70] sm:$0xff]
    %v220 = vld [vmem:[#allocation7 + $0x78] sm:$0xff]
    %v221 = vld [vmem:[#allocation7 + $0x80] sm:$0xff]
    %v222 = vld [vmem:[#allocation7 + $0x88] sm:$0xff]
    %v223 = vld [vmem:[#allocation7 + $0x90] sm:$0xff]
    %v224 = vld [vmem:[#allocation7 + $0x98] sm:$0xff]
    %v225 = vld [vmem:[#allocation7 + $0xa0] sm:$0xff]
    %v226 = vld [vmem:[#allocation7 + $0xa8] sm:$0xff]
    %v227 = vld [vmem:[#allocation7 + $0xb0] sm:$0xff]
    %v228 = vld [vmem:[#allocation7 + $0xb8] sm:$0xff]
    %v229 = vld [vmem:[#allocation7 + $0xc0] sm:$0xff]
    %v230 = vld [vmem:[#allocation7 + $0xc8] sm:$0xff]
    %v231 = vld [vmem:[#allocation7 + $0xd0] sm:$0xff]
    %v232 = vld [vmem:[#allocation7 + $0xd8] sm:$0xff]
    %v233 = vld [vmem:[#allocation7 + $0xe0] sm:$0xff]
    %v234 = vld [vmem:[#allocation7 + $0xe8] sm:$0xff]
    %v235 = vld [vmem:[#allocation7 + $0xf0] sm:$0xff]
    %v236 = vld [vmem:[#allocation7 + $0xf8] sm:$0xff]
    %v237 = vld [vmem:[#allocation7 + $0x100] sm:$0xff]
    %v238 = vld [vmem:[#allocation7 + $0x108] sm:$0xff]
    %v239 = vld [vmem:[#allocation7 + $0x110] sm:$0xff]
    %v240 = vld [vmem:[#allocation7 + $0x118] sm:$0xff]
    %v241 = vld [vmem:[#allocation7 + $0x120] sm:$0xff]
    %v242 = vld [vmem:[#allocation7 + $0x128] sm:$0xff]
    %v243 = vld [vmem:[#allocation7 + $0x130] sm:$0xff]
    %v244 = vld [vmem:[#allocation7 + $0x138] sm:$0xff]
    %v245 = vld [vmem:[#allocation7 + $0x140] sm:$0xff]
    %v246 = vld [vmem:[#allocation7 + $0x148] sm:$0xff]
    %v247 = vld [vmem:[#allocation7 + $0x150] sm:$0xff]
    %v248 = vld [vmem:[#allocation7 + $0x158] sm:$0xff]
    %v249 = vld [vmem:[#allocation7 + $0x160] sm:$0xff]
    %v250 = vld [vmem:[#allocation7 + $0x168] sm:$0xff]
    %v251 = vld [vmem:[#allocation7 + $0x170] sm:$0xff]
    %v252 = vld [vmem:[#allocation7 + $0x178] sm:$0xff]
    %v253 = vld [vmem:[#allocation7 + $0x180] sm:$0xff]
    %v254 = vld [vmem:[#allocation7 + $0x188] sm:$0xff]
    %v255 = vld [vmem:[#allocation7 + $0x190] sm:$0xff]
    %v256 = vld [vmem:[#allocation7 + $0x198] sm:$0xff]
    %v257 = vld [vmem:[#allocation7 + $0x1a0] sm:$0xff]
    %v258 = vld [vmem:[#allocation7 + $0x1a8] sm:$0xff]
    %v259 = vld [vmem:[#allocation7 + $0x1b0] sm:$0xff]
    %v260 = vld [vmem:[#allocation7 + $0x1b8] sm:$0xff]
    %v261 = vld [vmem:[#allocation7 + $0x1c0] sm:$0xff]
    %v262 = vld [vmem:[#allocation7 + $0x1c8] sm:$0xff]
    %v263 = vld [vmem:[#allocation7 + $0x1d0] sm:$0xff]
    %v264 = vld [vmem:[#allocation7 + $0x1d8] sm:$0xff]
    %v265 = vld [vmem:[#allocation7 + $0x1e0] sm:$0xff]
    %v266 = vld [vmem:[#allocation7 + $0x1e8] sm:$0xff]
    %v267 = vld [vmem:[#allocation7 + $0x1f0] sm:$0xff]
    %v268 = vld [vmem:[#allocation7 + $0x1f8] sm:$0xff]
    %v269 = vld [vmem:[%s4] sm:$0x3]
    %v271 = vlaneseq
    %v272 = vshrl.u32 %v271, 7
    %v273 = vsub.s32 0, %v272
    %v274 = vrot.slane %v269, %v273
    %v275 = vlaneseq
    %v276 = vshrl.u32 %v275, 7
    %v277 = vsub.s32 1, %v276
    %v278 = vrot.slane %v269, %v277
    %281 = vmatprep.subr.mxu0 %v236
    %282 = vmatpush1.msra.mxu0 %v235
    %283 = vmatprep.subr.mxu0 %v234
    %284 = vmatpush1.msra.mxu0 %v233
    %285 = vmatprep.subr.mxu0 %v232
    %286 = vmatpush1.msra.mxu0 %v231
    %287 = vmatprep.subr.mxu0 %v230
    %288 = vmatpush1.msra.mxu0 %v229
    %289 = vmatprep.subr.mxu0 %v228
    %290 = vmatpush1.msra.mxu0 %v227
    %291 = vmatprep.subr.mxu0 %v226
    %292 = vmatpush1.msra.mxu0 %v225
    %293 = vmatprep.subr.mxu0 %v224
    %294 = vmatpush1.msra.mxu0 %v223
    %295 = vmatprep.subr.mxu0 %v222
    %296 = vmatpush1.msra.mxu0 %v221
    %297 = vmatprep.subr.mxu0 %v220
    %298 = vmatpush1.msra.mxu0 %v219
    %299 = vmatprep.subr.mxu0 %v218
    %300 = vmatpush1.msra.mxu0 %v217
    %301 = vmatprep.subr.mxu0 %v216
    %302 = vmatpush1.msra.mxu0 %v215
    %303 = vmatprep.subr.mxu0 %v214
    %304 = vmatpush1.msra.mxu0 %v213
    %305 = vmatprep.subr.mxu0 %v212
    %306 = vmatpush1.msra.mxu0 %v211
    %307 = vmatprep.subr.mxu0 %v210
    %308 = vmatpush1.msra.mxu0 %v209
    %309 = vmatprep.subr.mxu0 %v208
    %310 = vmatpush1.msra.mxu0 %v207
    %311 = vmatprep.subr.mxu0 %v206
    %312 = vmatpush1.msra.mxu0 %v205
    %313 = vmatprep.subr.mxu0 %v268
    %314 = vmatpush2.msra.mxu0 %v267
    %315 = vmatprep.subr.mxu0 %v266
    %316 = vmatpush2.msra.mxu0 %v265
    %317 = vmatprep.subr.mxu0 %v264
    %318 = vmatpush2.msra.mxu0 %v263
    %319 = vmatprep.subr.mxu0 %v262
    %320 = vmatpush2.msra.mxu0 %v261
    %321 = vmatprep.subr.mxu0 %v260
    %322 = vmatpush2.msra.mxu0 %v259
    %323 = vmatprep.subr.mxu0 %v258
    %324 = vmatpush2.msra.mxu0 %v257
    %325 = vmatprep.subr.mxu0 %v256
    %326 = vmatpush2.msra.mxu0 %v255
    %327 = vmatprep.subr.mxu0 %v254
    %328 = vmatpush2.msra.mxu0 %v253
    %329 = vmatprep.subr.mxu0 %v252
    %330 = vmatpush2.msra.mxu0 %v251
    %331 = vmatprep.subr.mxu0 %v250
    %332 = vmatpush2.msra.mxu0 %v249
    %333 = vmatprep.subr.mxu0 %v248
    %334 = vmatpush2.msra.mxu0 %v247
    %335 = vmatprep.subr.mxu0 %v246
    %336 = vmatpush2.msra.mxu0 %v245
    %337 = vmatprep.subr.mxu0 %v244
    %338 = vmatpush2.msra.mxu0 %v243
    %339 = vmatprep.subr.mxu0 %v242
    %340 = vmatpush2.msra.mxu0 %v241
    %341 = vmatprep.subr.mxu0 %v240
    %342 = vmatpush2.msra.mxu0 %v239
    %343 = vmatprep.subr.mxu0 %v238
    %344 = vmatpush2.msra.mxu0 %v237
    %345 = vmatprep.mubr.f32.mxu0 %v204
    %346 = vmatmul.mubr.f32.gmra.mxu0 %v203
    %v347 = vpop.f32.mrf.mxu0
    %v348 = vadd.f32 %v274, %v347
    %v349 = vpop.f32.mrf.mxu0
    %v350 = vadd.f32 %v278, %v349
    %351 = vdwg.mxu0
    %v352 = vmax.f32 %v348, 0.0
    %v353 = vmax.f32 %v350, 0.0
    %v354 = vsel %vm199, %v352, %v348
    %v355 = vsel %vm200, %v353, %v350
    %v356 = vld [vmem:[#allocation8] sm:$0xff]
    %v357 = vld [vmem:[#allocation8 + $0x8] sm:$0xff]
    %v358 = vld [vmem:[#allocation8 + $0x10] sm:$0xff]
    %v359 = vld [vmem:[#allocation8 + $0x18] sm:$0xff]
    %v360 = vld [vmem:[#allocation8 + $0x20] sm:$0xff]
    %v361 = vld [vmem:[#allocation8 + $0x28] sm:$0xff]
    %v362 = vld [vmem:[#allocation8 + $0x30] sm:$0xff]
    %v363 = vld [vmem:[#allocation8 + $0x38] sm:$0xff]
    %v364 = vld [vmem:[#allocation8 + $0x40] sm:$0xff]
    %v365 = vld [vmem:[#allocation8 + $0x48] sm:$0xff]
    %v366 = vld [vmem:[#allocation8 + $0x50] sm:$0xff]
    %v367 = vld [vmem:[#allocation8 + $0x58] sm:$0xff]
    %v368 = vld [vmem:[#allocation8 + $0x60] sm:$0xff]
    %v369 = vld [vmem:[#allocation8 + $0x68] sm:$0xff]
    %v370 = vld [vmem:[#allocation8 + $0x70] sm:$0xff]
    %v371 = vld [vmem:[#allocation8 + $0x78] sm:$0xff]
    %v372 = vld [vmem:[#allocation8 + $0x80] sm:$0xff]
    %v373 = vld [vmem:[#allocation8 + $0x88] sm:$0xff]
    %v374 = vld [vmem:[#allocation8 + $0x90] sm:$0xff]
    %v375 = vld [vmem:[#allocation8 + $0x98] sm:$0xff]
    %v376 = vld [vmem:[#allocation8 + $0xa0] sm:$0xff]
    %v377 = vld [vmem:[#allocation8 + $0xa8] sm:$0xff]
    %v378 = vld [vmem:[#allocation8 + $0xb0] sm:$0xff]
    %v379 = vld [vmem:[#allocation8 + $0xb8] sm:$0xff]
    %v380 = vld [vmem:[#allocation8 + $0xc0] sm:$0xff]
    %v381 = vld [vmem:[#allocation8 + $0xc8] sm:$0xff]
    %v382 = vld [vmem:[#allocation8 + $0xd0] sm:$0xff]
    %v383 = vld [vmem:[#allocation8 + $0xd8] sm:$0xff]
    %v384 = vld [vmem:[#allocation8 + $0xe0] sm:$0xff]
    %v385 = vld [vmem:[#allocation8 + $0xe8] sm:$0xff]
    %v386 = vld [vmem:[#allocation8 + $0xf0] sm:$0xff]
    %v387 = vld [vmem:[#allocation8 + $0xf8] sm:$0xff]
    %v388 = vld [vmem:[%s6] sm:$0x1]
    %v390 = vlaneseq
    %v391 = vshrl.u32 %v390, 7
    %v392 = vsub.s32 0, %v391
    %v393 = vrot.slane %v388, %v392
    %395 = vmatprep.subr.mxu0 0.0
    %396 = vmatpush1.msra.mxu0 %v371
    %397 = vmatprep.subr.mxu0 0.0
    %398 = vmatpush1.msra.mxu0 %v370
    %399 = vmatprep.subr.mxu0 0.0
    %400 = vmatpush1.msra.mxu0 %v369
    %401 = vmatprep.subr.mxu0 0.0
    %402 = vmatpush1.msra.mxu0 %v368
    %403 = vmatprep.subr.mxu0 0.0
    %404 = vmatpush1.msra.mxu0 %v367
    %405 = vmatprep.subr.mxu0 0.0
    %406 = vmatpush1.msra.mxu0 %v366
    %407 = vmatprep.subr.mxu0 0.0
    %408 = vmatpush1.msra.mxu0 %v365
    %409 = vmatprep.subr.mxu0 0.0
    %410 = vmatpush1.msra.mxu0 %v364
    %411 = vmatprep.subr.mxu0 0.0
    %412 = vmatpush1.msra.mxu0 %v363
    %413 = vmatprep.subr.mxu0 0.0
    %414 = vmatpush1.msra.mxu0 %v362
    %415 = vmatprep.subr.mxu0 0.0
    %416 = vmatpush1.msra.mxu0 %v361
    %417 = vmatprep.subr.mxu0 0.0
    %418 = vmatpush1.msra.mxu0 %v360
    %419 = vmatprep.subr.mxu0 0.0
    %420 = vmatpush1.msra.mxu0 %v359
    %421 = vmatprep.subr.mxu0 0.0
    %422 = vmatpush1.msra.mxu0 %v358
    %423 = vmatprep.subr.mxu0 0.0
    %424 = vmatpush1.msra.mxu0 %v357
    %425 = vmatprep.subr.mxu0 0.0
    %426 = vmatpush1.msra.mxu0 %v356
    %427 = vmatprep.subr.mxu0 0.0
    %428 = vmatpush2.msra.mxu0 %v387
    %429 = vmatprep.subr.mxu0 0.0
    %430 = vmatpush2.msra.mxu0 %v386
    %431 = vmatprep.subr.mxu0 0.0
    %432 = vmatpush2.msra.mxu0 %v385
    %433 = vmatprep.subr.mxu0 0.0
    %434 = vmatpush2.msra.mxu0 %v384
    %435 = vmatprep.subr.mxu0 0.0
    %436 = vmatpush2.msra.mxu0 %v383
    %437 = vmatprep.subr.mxu0 0.0
    %438 = vmatpush2.msra.mxu0 %v382
    %439 = vmatprep.subr.mxu0 0.0
    %440 = vmatpush2.msra.mxu0 %v381
    %441 = vmatprep.subr.mxu0 0.0
    %442 = vmatpush2.msra.mxu0 %v380
    %443 = vmatprep.subr.mxu0 0.0
    %444 = vmatpush2.msra.mxu0 %v379
    %445 = vmatprep.subr.mxu0 0.0
    %446 = vmatpush2.msra.mxu0 %v378
    %447 = vmatprep.subr.mxu0 0.0
    %448 = vmatpush2.msra.mxu0 %v377
    %449 = vmatprep.subr.mxu0 0.0
    %450 = vmatpush2.msra.mxu0 %v376
    %451 = vmatprep.subr.mxu0 0.0
    %452 = vmatpush2.msra.mxu0 %v375
    %453 = vmatprep.subr.mxu0 0.0
    %454 = vmatpush2.msra.mxu0 %v374
    %455 = vmatprep.subr.mxu0 0.0
    %456 = vmatpush2.msra.mxu0 %v373
    %457 = vmatprep.subr.mxu0 0.0
    %458 = vmatpush2.msra.mxu0 %v372
    %459 = vmatprep.mubr.f32.mxu0 %v355
    %460 = vmatmul.mubr.f32.gmra.mxu0 %v354
    %v461 = vpop.f32.mrf.mxu0
    %v462 = vadd.f32 %v393, %v461
    %v463 = vpop.f32.mrf.mxu0
    %464 = vdwg.mxu0
    %465 = vst [vmem:[#allocation10] sm:$0xff] %v462
    // Predicated region
    $region46: #{tpu_custom_call.1} parent=1 // pred_check
      _
    $region47: #{tpu_custom_call.1} parent=1 // pred_check_branch
      %467 = sbr.rel (0) target = $region49
    $region48: #{tpu_custom_call.1} parent=1 // pred_region
      %s469 = ssub.s32 128, 128
      %470 = vsyncadd [#allocation4], %s469
      %s472 = sshll.u32 [#allocation10], 4
      %s473 = int_to_ptr.vmem [resolvable:$true] %s472
      %475 = dma.vmem_to_hbm [thread:$0]  %s473, 128, %s7, [#allocation4]
    $region49: #{tpu_custom_call.1} parent=1 // pred_fallthru
      _
    // Predicated region
    $region50: #{tpu_custom_call.1} parent=1 // pred_check
      _
    $region51: #{tpu_custom_call.1} parent=1 // pred_check_branch
      %477 = sbr.rel (0) target = $region53
    $region52: #{tpu_custom_call.1} parent=1 // pred_region
      %478 = dma.done [#allocation4], 128
    $region53: #{tpu_custom_call.1} parent=1 // pred_fallthru
      _
    %479 = vsyncpa [#allocation3], 1
    %480 = vsyncpa [#allocation6], 1
    %481 = vsyncpa [#allocation9], 1
    %482 = vsyncpa [#allocation4], 1

</llo_original>
